<compile_context>
chip_gen: v6e
topology: v6e:2x2x1
jax: 0.10.0
libtpu: 0.0.40
codegen_flags: <defaults>
</compile_context>

<pallas_src>
import jax
import jax.numpy as jnp
from jax.experimental import pallas as pl
from jax.experimental.pallas import tpu as pltpu

_LANE = 128
_PER_BUF_BYTES = 4 * 1024 * 1024        # ~4 MiB per tile buffer
_VMEM_LIMIT_BYTES = 48 * 1024 * 1024    # 6 buffers * 4 MiB = 24 MiB + headroom


def _two_view_kernel(x_ref, p_ref, v1_ref, v2_ref):
    # x_ref: (TR, TL) tile of the flattened (B*C, H*W) image batch.
    # p_ref: (TR, 4) per-row packed params: [s1 | b1 | s2 | b2].
    x = x_ref[...]
    p = p_ref[...]
    s1 = p[:, 0:1]
    b1 = p[:, 1:2]
    s2 = p[:, 2:3]
    b2 = p[:, 3:4]
    v1_ref[...] = (x * s1 + b1).astype(v1_ref.dtype)
    v2_ref[...] = (x * s2 + b2).astype(v2_ref.dtype)


def _row_align(dtype):
    # Packed-sublane factor: 8 rows for 32-bit, 16 for 16-bit, 32 for 8-bit.
    return {4: 8, 2: 16, 1: 32}.get(jnp.dtype(dtype).itemsize, 8)


def _tile_sizes(N, M, dtype):
    """Aligned (TR, TL) tile for a cdiv grid under a 6-buffer VMEM budget."""
    itemsize = jnp.dtype(dtype).itemsize
    ralign = _row_align(dtype)
    per_buf_elems = max(_LANE * ralign, _PER_BUF_BYTES // itemsize)

    # Lane tile: a multiple of 128 (boundary block masked by the cdiv grid),
    # or the full dim when M < 128 (full-dim blocks are always legal).
    if M < _LANE:
        TL = M
    else:
        max_tl = max(_LANE, ((per_buf_elems // ralign) // _LANE) * _LANE)
        TL = min((M // _LANE) * _LANE, max_tl)

    # Row tile: a multiple of the packed-sublane factor, capped so
    # 6 * TR * TL * itemsize stays within the budget.
    if N < ralign:
        TR = N
    else:
        max_tr = max(ralign, ((per_buf_elems // TL) // ralign) * ralign)
        TR = min((N // ralign) * ralign, max_tr)

    # v7x megacore: guarantee >= 2 blocks along a "parallel" axis when the
    # input allows it, so the grid shards across both TensorCores.
    if pl.cdiv(N, TR) * pl.cdiv(M, TL) < 2:
        if N >= 2 * ralign:
            TR = ralign * (N // (2 * ralign))
        elif M >= 2 * _LANE:
            TL = _LANE * (M // (2 * _LANE))
    return TR, TL


def two_view_collate(x, labels, mean1, inv_std1, mean2, inv_std2, out_dtype=None):
    """Pallas implementation of TwoViewCollateFunction.forward.

    Args:
      x:        (B, C, H, W) float batch of images (already stacked).
      labels:   (B,) integer labels.
      mean*/inv_std*: (C,) per-channel transform parameters (deterministic
                      stand-ins for transform1 / transform2).
      out_dtype: optional view dtype (e.g. jnp.bfloat16 to halve write traffic);
                 defaults to x.dtype.

    Returns:
      ((view1, view2), labels) with view_k of shape (B, C, H, W).
    """
    B, C, H, W = x.shape
    N = B * C           # rows: one per (batch, channel) pair
    M = H * W           # lanes: flattened spatial dim (lane-dense layout)
    out_dtype = x.dtype if out_dtype is None else out_dtype

    x2 = x.reshape(N, M)

    # Fold the affine into scale/bias form and pack all four per-row columns
    # into one tiny (N, 4) array (row index = b*C + c, matching the reshape).
    per_chan = jnp.stack(
        [
            inv_std1.astype(x.dtype),
            (-mean1 * inv_std1).astype(x.dtype),
            inv_std2.astype(x.dtype),
            (-mean2 * inv_std2).astype(x.dtype),
        ],
        axis=-1,
    )                                   # (C, 4)
    params = jnp.tile(per_chan, (B, 1))  # (N, 4)

    TR, TL = _tile_sizes(N, M, x.dtype)
    grid = (pl.cdiv(N, TR), pl.cdiv(M, TL))

    img_spec = pl.BlockSpec((TR, TL), lambda i, j: (i, j))
    par_spec = pl.BlockSpec((TR, 4), lambda i, j: (i, 0))
    out_spec = pl.BlockSpec((TR, TL), lambda i, j: (i, j))

    view1, view2 = pl.pallas_call(
        _two_view_kernel,
        out_shape=(
            jax.ShapeDtypeStruct((N, M), out_dtype),
            jax.ShapeDtypeStruct((N, M), out_dtype),
        ),
        grid_spec=pl.GridSpec(
            grid=grid,
            in_specs=[img_spec, par_spec],
            out_specs=[out_spec, out_spec],
        ),
        compiler_params=pltpu.CompilerParams(
            dimension_semantics=("parallel", "parallel"),
            vmem_limit_bytes=_VMEM_LIMIT_BYTES,
        ),
    )(x2, params)

    view1 = view1.reshape(B, C, H, W)
    view2 = view2.reshape(B, C, H, W)
    labels_out = labels.astype(jnp.int32)  # torch.LongTensor analogue
    return (view1, view2), labels_out


def _reference(x, mean, inv_std):
    C = x.shape[1]
    return (x - mean.reshape(1, C, 1, 1)) * inv_std.reshape(1, C, 1, 1)


if __name__ == "__main__":
    key = jax.random.PRNGKey(0)
    k_img, k_lab = jax.random.split(key)

    # Primary (lane-dense) case: H*W = 256 is a multiple of 128 -> grid (1, 2).
    B, C, H, W = 2, 4, 16, 16
    x = jax.random.normal(k_img, (B, C, H, W), dtype=jnp.float32)
    labels = jax.random.randint(k_lab, (B,), 0, 10, dtype=jnp.int32)

    mean1 = jnp.linspace(0.0, 0.3, C, dtype=jnp.float32)
    inv_std1 = jnp.linspace(1.0, 2.0, C, dtype=jnp.float32)
    mean2 = jnp.linspace(-0.2, 0.2, C, dtype=jnp.float32)
    inv_std2 = jnp.linspace(0.5, 1.5, C, dtype=jnp.float32)

    (v1, v2), labs = two_view_collate(x, labels, mean1, inv_std1, mean2, inv_std2)
    jax.block_until_ready((v1, v2, labs))

    assert v1.shape == (B, C, H, W) and v2.shape == (B, C, H, W)
    assert labs.shape == (B,) and labs.dtype == jnp.int32
    assert jnp.allclose(v1, _reference(x, mean1, inv_std1), atol=1e-5, rtol=1e-5)
    assert jnp.allclose(v2, _reference(x, mean2, inv_std2), atol=1e-5, rtol=1e-5)

    # Small-lane case: M = 70 < 128 -> full-dim lane block, full-dim row block.
    B2, C2, H2, W2 = 2, 3, 7, 10
    x_odd = jax.random.normal(jax.random.PRNGKey(1), (B2, C2, H2, W2), jnp.float32)
    labels_odd = jnp.arange(B2, dtype=jnp.int32)
    m1o = jnp.linspace(0.1, 0.4, C2, dtype=jnp.float32)
    s1o = jnp.linspace(0.8, 1.6, C2, dtype=jnp.float32)
    m2o = jnp.linspace(-0.3, 0.3, C2, dtype=jnp.float32)
    s2o = jnp.linspace(0.7, 1.3, C2, dtype=jnp.float32)
    (o1, o2), lo = two_view_collate(x_odd, labels_odd, m1o, s1o, m2o, s2o)
    jax.block_until_ready((o1, o2, lo))
    assert jnp.allclose(o1, _reference(x_odd, m1o, s1o), atol=1e-5, rtol=1e-5)
    assert jnp.allclose(o2, _reference(x_odd, m2o, s2o), atol=1e-5, rtol=1e-5)

    # cdiv-boundary case: M = 200 (not a multiple of 128) -> TL = 128,
    # grid (1, 2), only the last lane block masked.
    B3, C3, H3, W3 = 2, 3, 10, 20
    x_bnd = jax.random.normal(jax.random.PRNGKey(2), (B3, C3, H3, W3), jnp.float32)
    labels_bnd = jnp.arange(B3, dtype=jnp.int32)
    (q1, q2), lq = two_view_collate(x_bnd, labels_bnd, m1o, s1o, m2o, s2o)
    jax.block_until_ready((q1, q2, lq))
    assert jnp.allclose(q1, _reference(x_bnd, m1o, s1o), atol=1e-5, rtol=1e-5)
    assert jnp.allclose(q2, _reference(x_bnd, m2o, s2o), atol=1e-5, rtol=1e-5)

    print("KERNEL_OK")
</pallas_src>

<mosaic_0001>
module attributes {stable_mosaic.version = 11 : i64} {
  func.func @_two_view_kernel(%arg0: i32, %arg1: i32, %arg2: memref<8x128xf32, #tpu.memory_space<vmem>>, %arg3: memref<8x4xf32, #tpu.memory_space<vmem>>, %arg4: memref<8x128xf32, #tpu.memory_space<vmem>>, %arg5: memref<8x128xf32, #tpu.memory_space<vmem>>) attributes {dimension_semantics = [#tpu.dimension_semantics<parallel>, #tpu.dimension_semantics<parallel>], iteration_bounds = array<i64: 1, 2>, scalar_prefetch = 0 : i64, scratch_operands = 0 : i64, tpu.core_type = #tpu.core_type<tc>, window_params = [{transform_indices = @transform_0, window_bounds = array<i64: 8, 128>}, {transform_indices = @transform_1, window_bounds = array<i64: 8, 4>}, {transform_indices = @transform_2, window_bounds = array<i64: 8, 128>}, {transform_indices = @transform_3, window_bounds = array<i64: 8, 128>}]} {
    %c0 = arith.constant 0 : index
    %c0_0 = arith.constant 0 : index
    %0 = vector.load %arg2[%c0, %c0_0] : memref<8x128xf32, #tpu.memory_space<vmem>>, vector<8x128xf32>
    %c0_1 = arith.constant 0 : index
    %c0_2 = arith.constant 0 : index
    %1 = vector.load %arg3[%c0_1, %c0_2] : memref<8x4xf32, #tpu.memory_space<vmem>>, vector<8x4xf32>
    %2 = vector.extract_strided_slice %1 {offsets = [0, 0], sizes = [8, 1], strides = [1, 1]} : vector<8x4xf32> to vector<8x1xf32>
    %3 = vector.extract_strided_slice %1 {offsets = [0, 1], sizes = [8, 1], strides = [1, 1]} : vector<8x4xf32> to vector<8x1xf32>
    %4 = vector.extract_strided_slice %1 {offsets = [0, 2], sizes = [8, 1], strides = [1, 1]} : vector<8x4xf32> to vector<8x1xf32>
    %5 = vector.extract_strided_slice %1 {offsets = [0, 3], sizes = [8, 1], strides = [1, 1]} : vector<8x4xf32> to vector<8x1xf32>
    %6 = vector.broadcast %2 : vector<8x1xf32> to vector<8x128xf32>
    %7 = arith.mulf %0, %6 : vector<8x128xf32>
    %8 = vector.broadcast %3 : vector<8x1xf32> to vector<8x128xf32>
    %9 = arith.addf %7, %8 : vector<8x128xf32>
    %c0_3 = arith.constant 0 : index
    %c0_4 = arith.constant 0 : index
    %10 = vector.load %arg4[%c0_3, %c0_4] : memref<8x128xf32, #tpu.memory_space<vmem>>, vector<8x128xf32>
    tpu.vector_store %arg4[%c0_3, %c0_4], %9 {strides = array<i32>} : memref<8x128xf32, #tpu.memory_space<vmem>>, vector<8x128xf32>,
    %11 = vector.broadcast %4 : vector<8x1xf32> to vector<8x128xf32>
    %12 = arith.mulf %0, %11 : vector<8x128xf32>
    %13 = vector.broadcast %5 : vector<8x1xf32> to vector<8x128xf32>
    %14 = arith.addf %12, %13 : vector<8x128xf32>
    %c0_5 = arith.constant 0 : index
    %c0_6 = arith.constant 0 : index
    %15 = vector.load %arg5[%c0_5, %c0_6] : memref<8x128xf32, #tpu.memory_space<vmem>>, vector<8x128xf32>
    tpu.vector_store %arg5[%c0_5, %c0_6], %14 {strides = array<i32>} : memref<8x128xf32, #tpu.memory_space<vmem>>, vector<8x128xf32>,
    return
  }
  func.func @transform_0(%arg0: i32, %arg1: i32) -> (i32, i32) {
    %c0_i32 = arith.constant 0 : i32
    return %arg0, %arg1 : i32, i32
  }
  func.func @transform_1(%arg0: i32, %arg1: i32) -> (i32, i32) {
    %c0_i32 = arith.constant 0 : i32
    %c0_i32_0 = arith.constant 0 : i32
    return %arg0, %c0_i32 : i32, i32
  }
  func.func @transform_2(%arg0: i32, %arg1: i32) -> (i32, i32) {
    %c0_i32 = arith.constant 0 : i32
    return %arg0, %arg1 : i32, i32
  }
  func.func @transform_3(%arg0: i32, %arg1: i32) -> (i32, i32) {
    %c0_i32 = arith.constant 0 : i32
    return %arg0, %arg1 : i32, i32
  }
}

</mosaic_0001>

<llo_original>
// kernel: tpu_custom_call.1
$region0: #{tpu_custom_call.1}
  #allocation0 [shape = 'u32[]', space=smem, size = 0x4, offset = 0x4, fixed_abs, tag = 'smem constant byte address 0x4 - core index']
  #allocation1 [shape = 'u32[144,128]{1,0:T(1,128)}', space=vmem, size = 0x12000, scoped, tag = 'internal scratch']
  %s0 = inlined_call_operand.hbm [shape: f32[8,256], index: 0, kind: input, shape index: {}]
  %s1 = inlined_call_operand.vmem [shape: f32[8,4], index: 1, kind: input, shape index: {}]
  %s2 = inlined_call_operand.hbm [shape: f32[8,256], index: 2, kind: output, shape index: {0}]
  %s3 = inlined_call_operand.hbm [shape: f32[8,256], index: 3, kind: output, shape index: {1}]
  %4 = xla_tuple %s2, %s3
  %s5 = sld [smem:[#allocation0]]
  $region53: #{tpu_custom_call.1} parent=0
    _
  %s7 = ssub.s32 1, %s5
  %s8 = scalar_select 0, %s7, %s5
  $region1: #{tpu_custom_call.1} parent=0
    #allocation2 [shape = 'u8[8192]{0}', space=vmem, size = 0x2000, scoped, tag = 'input window, operand 0']
    #allocation3 [shape = 's32[2]{0}', space=sflag, size = 0x8, scoped, tag = 'scoped memory for tpu_custom_call.1']
    #allocation4 [shape = 's32[2]{0}', space=sflag, size = 0x8, scoped, tag = 'scoped memory for tpu_custom_call.1']
    #allocation5 [shape = 'u8[8192]{0}', space=vmem, size = 0x2000, scoped, tag = 'output window, operand 0']
    #allocation6 [shape = 'u8[8192]{0}', space=vmem, size = 0x2000, scoped, tag = 'output window, operand 1']
    #allocation7 [shape = 's32[2]{0}', space=sflag, size = 0x8, scoped, tag = 'scoped memory for tpu_custom_call.1']
    %9 = vsyncpa [#allocation3], 0
    %s10 = scalar_lea.sflag [#allocation3], 1
    %11 = vsyncpa %s10, 0
    %12 = vsyncpa [#allocation4], 0
    %s13 = scalar_lea.sflag [#allocation4], 1
    %14 = vsyncpa %s13, 0
    %15 = vsyncpa [#allocation7], 0
    %s16 = scalar_lea.sflag [#allocation7], 1
    %17 = vsyncpa %s16, 0
    loop: start=0, step=1, limit=4
    $region2: #{tpu_custom_call.1} parent=1 // loop_pre_header
      _
    $region3: #{tpu_custom_call.1} parent=1 // loop_header
      %s19 = sphi 0, %s23
      %p20 = scmp.ge.s32.totalorder %s19, 4
      %s26 = sphi 0, %s38
      %s27 = sphi 0, %s34
      %s28 = sphi 0, %s26
      %s29 = sphi 0, %s27
      %s30 = sphi 0, %s28
      %s31 = sphi 0, %s29
      %s43 = sphi 0, %s45
      %s46 = sphi 0, %s43
      %s47 = sphi 0, %s46
      %s63 = sphi 0, %s47
      %s69 = sphi 0, %s71
      %s72 = sphi 0, %s69
      %s73 = sphi 0, %s72
      %s89 = sphi 0, %s73
      %s97 = sphi 0, %s99
      %s100 = sphi 0, %s97
      %s101 = sphi 0, %s100
      %s117 = sphi 0, %s101
      %s125 = sphi 0, %s127
      %s128 = sphi 0, %s125
      %s129 = sphi 0, %s128
      %s145 = sphi 0, %s129
    $region4: #{tpu_custom_call.1} parent=1 // loop_header_branch
      %22 = sbr.rel (%p20) target = $region8
    $region5: #{tpu_custom_call.1} parent=1 // loop_body
      %s24 = ssub.s32 %s19, 1
      %s25 = ssub.s32 %s19, 2
      %s32 = sadd.s32 1, %s27
      %p33 = scmp.ge.s32.totalorder %s32, 2
      %s34 = scalar_select %p33, 0, %s32
      %s35 = sadd.s32 1, %s26
      %s36 = scalar_select %p33, %s35, %s26
      %p37 = scmp.ge.s32.totalorder %s36, 1
      %s38 = scalar_select %p37, 0, %s36
      %s39 = ssub.s32 %s26, %s38
      %s40 = ssub.s32 %s27, %s34
      %s41 = sor.u32 %s39, %s40
      %p42 = scmp.eq.s32.totalorder %s41, 0
      %s44 = sadd.s32 %s43, 1
      %s45 = scalar_select %p42, %s43, %s44
      %p48 = pneg %p42
      %p49 = scmp.eq.s32.totalorder %s19, 1
      %p50 = por %p48, %p49
      %p51 = scmp.ne.s32.totalorder %s43, %s46
      %p52 = scmp.eq.s32.totalorder %s19, 0
      %p53 = por %p51, %p52
      %p54 = scmp.ne.s32.totalorder %s43, %s46
      %p55 = scmp.eq.s32.totalorder %s24, 1
      %p56 = por %p54, %p55
      %p57 = scmp.ne.s32.totalorder %s46, %s47
      %p58 = scmp.eq.s32.totalorder %s24, 0
      %p59 = por %p57, %p58
      %p60 = scmp.ne.s32.totalorder %s46, %s47
      %p61 = scmp.eq.s32.totalorder %s25, 1
      %p62 = por %p60, %p61
      %p64 = scmp.ne.s32.totalorder %s47, %s63
      %p65 = scmp.eq.s32.totalorder %s25, 0
      %p66 = por %p64, %p65
      %s67 = ssub.s32 %s26, %s38
      %p68 = scmp.eq.s32.totalorder %s67, 0
      %s70 = sadd.s32 %s69, 1
      %s71 = scalar_select %p68, %s69, %s70
      %p74 = pneg %p68
      %p75 = scmp.eq.s32.totalorder %s19, 1
      %p76 = por %p74, %p75
      %p77 = scmp.ne.s32.totalorder %s69, %s72
      %p78 = scmp.eq.s32.totalorder %s19, 0
      %p79 = por %p77, %p78
      %p80 = scmp.ne.s32.totalorder %s69, %s72
      %p81 = scmp.eq.s32.totalorder %s24, 1
      %p82 = por %p80, %p81
      %p83 = scmp.ne.s32.totalorder %s72, %s73
      %p84 = scmp.eq.s32.totalorder %s24, 0
      %p85 = por %p83, %p84
      %p86 = scmp.ne.s32.totalorder %s72, %s73
      %p87 = scmp.eq.s32.totalorder %s25, 1
      %p88 = por %p86, %p87
      %p90 = scmp.ne.s32.totalorder %s73, %s89
      %p91 = scmp.eq.s32.totalorder %s25, 0
      %p92 = por %p90, %p91
      %s93 = ssub.s32 %s26, %s38
      %s94 = ssub.s32 %s27, %s34
      %s95 = sor.u32 %s93, %s94
      %p96 = scmp.eq.s32.totalorder %s95, 0
      %s98 = sadd.s32 %s97, 1
      %s99 = scalar_select %p96, %s97, %s98
      %p102 = pneg %p96
      %p103 = scmp.eq.s32.totalorder %s19, 1
      %p104 = por %p102, %p103
      %p105 = scmp.ne.s32.totalorder %s97, %s100
      %p106 = scmp.eq.s32.totalorder %s19, 0
      %p107 = por %p105, %p106
      %p108 = scmp.ne.s32.totalorder %s97, %s100
      %p109 = scmp.eq.s32.totalorder %s24, 1
      %p110 = por %p108, %p109
      %p111 = scmp.ne.s32.totalorder %s100, %s101
      %p112 = scmp.eq.s32.totalorder %s24, 0
      %p113 = por %p111, %p112
      %p114 = scmp.ne.s32.totalorder %s100, %s101
      %p115 = scmp.eq.s32.totalorder %s25, 1
      %p116 = por %p114, %p115
      %p118 = scmp.ne.s32.totalorder %s101, %s117
      %p119 = scmp.eq.s32.totalorder %s25, 0
      %p120 = por %p118, %p119
      %s121 = ssub.s32 %s26, %s38
      %s122 = ssub.s32 %s27, %s34
      %s123 = sor.u32 %s121, %s122
      %p124 = scmp.eq.s32.totalorder %s123, 0
      %s126 = sadd.s32 %s125, 1
      %s127 = scalar_select %p124, %s125, %s126
      %p130 = pneg %p124
      %p131 = scmp.eq.s32.totalorder %s19, 1
      %p132 = por %p130, %p131
      %p133 = scmp.ne.s32.totalorder %s125, %s128
      %p134 = scmp.eq.s32.totalorder %s19, 0
      %p135 = por %p133, %p134
      %p136 = scmp.ne.s32.totalorder %s125, %s128
      %p137 = scmp.eq.s32.totalorder %s24, 1
      %p138 = por %p136, %p137
      %p139 = scmp.ne.s32.totalorder %s128, %s129
      %p140 = scmp.eq.s32.totalorder %s24, 0
      %p141 = por %p139, %p140
      %p142 = scmp.ne.s32.totalorder %s128, %s129
      %p143 = scmp.eq.s32.totalorder %s25, 1
      %p144 = por %p142, %p143
      %p146 = scmp.ne.s32.totalorder %s129, %s145
      %p147 = scmp.eq.s32.totalorder %s25, 0
      %p148 = por %p146, %p147
      %p149 = scmp.le.s32.totalorder 1, %s19
      %p150 = scmp.lt.s32.totalorder %s19, 3
      %p151 = pnand %p149, %p150
      %p152 = pneg %p151
      // Predicated region
      $region9: #{tpu_custom_call.1} parent=5 // pred_check
        _
      $region10: #{tpu_custom_call.1} parent=5 // pred_check_branch
        %154 = sbr.rel (%p151) target = $region12
      $region11: #{tpu_custom_call.1} parent=5 // pred_region
        %s155 = ssub.s32 %s19, 1
        // Predicated region
        $region13: #{tpu_custom_call.1} parent=11 // pred_check
          %p156 = pneg %p85
        $region14: #{tpu_custom_call.1} parent=11 // pred_check_branch
          %158 = sbr.rel (%p156) target = $region16
        $region15: #{tpu_custom_call.1} parent=11 // pred_region
          %p159 = scmp.lt.s32.totalorder %s28, 0
          %s160 = scalar_select %p159, %s28, 0
          %s161 = smul.addr %s160, 8
          %s162 = scalar_lea.vmem %s1, %s161
        $region16: #{tpu_custom_call.1} parent=11 // pred_fallthru
          _
      $region12: #{tpu_custom_call.1} parent=5 // pred_fallthru
        _
      %p163 = scmp.lt.s32.totalorder %s19, 2
      // Predicated region
      $region17: #{tpu_custom_call.1} parent=5 // pred_check
        %p164 = pneg %p163
      $region18: #{tpu_custom_call.1} parent=5 // pred_check_branch
        %166 = sbr.rel (%p164) target = $region20
      $region19: #{tpu_custom_call.1} parent=5 // pred_region
        // Predicated region
        $region21: #{tpu_custom_call.1} parent=19 // pred_check
          %p167 = pneg %p53
        $region22: #{tpu_custom_call.1} parent=19 // pred_check_branch
          %169 = sbr.rel (%p167) target = $region24
        $region23: #{tpu_custom_call.1} parent=19 // pred_region
          %s170 = sand.u32 %s43, 1
          %s171 = scalar_lea.sflag [#allocation3], %s170
          %s172 = sand.u32 %s43, 1
          %s173 = smul.addr %s172, 8
          %s174 = scalar_lea.vmem [#allocation2], %s173
          %s176 = ssub.s32 128, 128
          %177 = vsyncadd %s171, %s176
          %s178 = smul.addr %s26, 2
          %s179 = sadd.s32 %s27, %s178
          %s180 = smul.addr %s179, 128
          %s181 = scalar_lea.hbm %s0, %s180
          %s183 = sshll.u32 %s174, 4
          %s184 = int_to_ptr.vmem [resolvable:$true] %s183
          %186 = dma.hbm_to_vmem [thread:$0]  %s181, 128, %s184, %s171
        $region24: #{tpu_custom_call.1} parent=19 // pred_fallthru
          _
      $region20: #{tpu_custom_call.1} parent=5 // pred_fallthru
        _
      %p187 = scmp.le.s32.totalorder 1, %s19
      %p188 = scmp.lt.s32.totalorder %s19, 3
      %p189 = pnand %p187, %p188
      %p190 = pneg %p189
      // Predicated region
      $region25: #{tpu_custom_call.1} parent=5 // pred_check
        _
      $region26: #{tpu_custom_call.1} parent=5 // pred_check_branch
        %192 = sbr.rel (%p189) target = $region28
      $region27: #{tpu_custom_call.1} parent=5 // pred_region
        %s193 = ssub.s32 %s19, 1
        %s194 = sand.u32 %s46, 1
        %s195 = scalar_lea.sflag [#allocation3], %s194
        %s196 = sand.u32 %s46, 1
        %s197 = smul.addr %s196, 8
        %s198 = scalar_lea.vmem [#allocation2], %s197
        // Predicated region
        $region29: #{tpu_custom_call.1} parent=27 // pred_check
          %p199 = pneg %p59
        $region30: #{tpu_custom_call.1} parent=27 // pred_check_branch
          %201 = sbr.rel (%p199) target = $region32
        $region31: #{tpu_custom_call.1} parent=27 // pred_region
          %202 = dma.done %s195, 128
        $region32: #{tpu_custom_call.1} parent=27 // pred_fallthru
          _
        %s203 = sand.u32 %s46, 1
        %s204 = scalar_lea.sflag [#allocation3], %s203
        %s205 = sand.u32 %s46, 1
        %s206 = smul.addr %s205, 8
        %s207 = scalar_lea.vmem [#allocation2], %s206
        %p208 = pneg %p59
        %p209 = pneg %p56
        %p210 = scmp.lt.s32.totalorder %s28, 0
        %s211 = scalar_select %p210, %s28, 0
        %s212 = smul.addr %s211, 8
        %s213 = scalar_lea.vmem %s1, %s212
        %p214 = pneg %p85
        %p215 = pneg %p82
        %p216 = pneg %p113
        %p217 = pneg %p110
        %s218 = sand.u32 %s100, 1
        %s219 = scalar_lea.sflag [#allocation4], %s218
        %s220 = sand.u32 %s100, 1
        %s221 = smul.addr %s220, 8
        %s222 = scalar_lea.vmem [#allocation5], %s221
        %p223 = pneg %p141
        %p224 = pneg %p138
        %s225 = sand.u32 %s128, 1
        %s226 = scalar_lea.sflag [#allocation7], %s225
        %s227 = sand.u32 %s128, 1
        %s228 = smul.addr %s227, 8
        %s229 = scalar_lea.vmem [#allocation6], %s228
        %p230 = scmp.lt.s32.totalorder %s28, 0
        %s231 = scalar_select %p230, %s28, 0
        %s232 = smul.addr %s231, 8
        %s233 = scalar_lea.vmem %s1, %s232
        %v234 = vld [vmem:[%s198] sm:$0xff]
        %v235 = vld [vmem:[%s233] sm:$0xff]
        %237 = vset.pattern.permute.xlu0 0
        %238 = vperm.xlu0 %237, %v235
        %v239 = vpop.permute.xlu0 %238
        %v241 = vmul.f32 %v234, %v239
        %242 = vset.pattern.permute.xlu0 1
        %243 = vperm.xlu0 %242, %v235
        %v244 = vpop.permute.xlu0 %243
        %v246 = vadd.f32 %v241, %v244
        %247 = vst [vmem:[%s222] sm:$0xff] %v246
        %248 = vset.pattern.permute.xlu0 2
        %249 = vperm.xlu0 %248, %v235
        %v250 = vpop.permute.xlu0 %249
        %v252 = vmul.f32 %v234, %v250
        %253 = vset.pattern.permute.xlu0 3
        %254 = vperm.xlu0 %253, %v235
        %v255 = vpop.permute.xlu0 %254
        %v257 = vadd.f32 %v252, %v255
        %258 = vst [vmem:[%s229] sm:$0xff] %v257
        %s259 = sand.u32 %s100, 1
        %s260 = scalar_lea.sflag [#allocation4], %s259
        %s261 = sand.u32 %s100, 1
        %s262 = smul.addr %s261, 8
        %s263 = scalar_lea.vmem [#allocation5], %s262
        %s264 = sand.u32 %s128, 1
        %s265 = scalar_lea.sflag [#allocation7], %s264
        %s266 = sand.u32 %s128, 1
        %s267 = smul.addr %s266, 8
        %s268 = scalar_lea.vmem [#allocation6], %s267
        // Predicated region
        $region33: #{tpu_custom_call.1} parent=27 // pred_check
          %p269 = pneg %p110
        $region34: #{tpu_custom_call.1} parent=27 // pred_check_branch
          %271 = sbr.rel (%p269) target = $region36
        $region35: #{tpu_custom_call.1} parent=27 // pred_region
          %s273 = ssub.s32 128, 128
          %274 = vsyncadd %s260, %s273
          %s275 = smul.addr %s28, 2
          %s276 = sadd.s32 %s29, %s275
          %s277 = smul.addr %s276, 128
          %s278 = scalar_lea.hbm %s2, %s277
          %s280 = sshll.u32 %s263, 4
          %s281 = int_to_ptr.vmem [resolvable:$true] %s280
          %283 = dma.vmem_to_hbm [thread:$0]  %s281, 128, %s278, %s260
        $region36: #{tpu_custom_call.1} parent=27 // pred_fallthru
          _
        // Predicated region
        $region37: #{tpu_custom_call.1} parent=27 // pred_check
          %p284 = pneg %p138
        $region38: #{tpu_custom_call.1} parent=27 // pred_check_branch
          %286 = sbr.rel (%p284) target = $region40
        $region39: #{tpu_custom_call.1} parent=27 // pred_region
          %s288 = ssub.s32 128, 128
          %289 = vsyncadd %s265, %s288
          %s290 = smul.addr %s28, 2
          %s291 = sadd.s32 %s29, %s290
          %s292 = smul.addr %s291, 128
          %s293 = scalar_lea.hbm %s3, %s292
          %s295 = sshll.u32 %s268, 4
          %s296 = int_to_ptr.vmem [resolvable:$true] %s295
          %298 = dma.vmem_to_hbm [thread:$0]  %s296, 128, %s293, %s265
        $region40: #{tpu_custom_call.1} parent=27 // pred_fallthru
          _
      $region28: #{tpu_custom_call.1} parent=5 // pred_fallthru
        _
      %p299 = scmp.le.s32.totalorder 2, %s19
      // Predicated region
      $region41: #{tpu_custom_call.1} parent=5 // pred_check
        %p300 = pneg %p299
      $region42: #{tpu_custom_call.1} parent=5 // pred_check_branch
        %302 = sbr.rel (%p300) target = $region44
      $region43: #{tpu_custom_call.1} parent=5 // pred_region
        %s303 = ssub.s32 %s19, 2
        // Predicated region
        $region45: #{tpu_custom_call.1} parent=43 // pred_check
          %p304 = pneg %p116
        $region46: #{tpu_custom_call.1} parent=43 // pred_check_branch
          %306 = sbr.rel (%p304) target = $region48
        $region47: #{tpu_custom_call.1} parent=43 // pred_region
          %s307 = sand.u32 %s101, 1
          %s308 = scalar_lea.sflag [#allocation4], %s307
          %s309 = sand.u32 %s101, 1
          %s310 = smul.addr %s309, 8
          %s311 = scalar_lea.vmem [#allocation5], %s310
          %312 = dma.done %s308, 128
        $region48: #{tpu_custom_call.1} parent=43 // pred_fallthru
          _
        // Predicated region
        $region49: #{tpu_custom_call.1} parent=43 // pred_check
          %p313 = pneg %p144
        $region50: #{tpu_custom_call.1} parent=43 // pred_check_branch
          %315 = sbr.rel (%p313) target = $region52
        $region51: #{tpu_custom_call.1} parent=43 // pred_region
          %s316 = sand.u32 %s129, 1
          %s317 = scalar_lea.sflag [#allocation7], %s316
          %s318 = sand.u32 %s129, 1
          %s319 = smul.addr %s318, 8
          %s320 = scalar_lea.vmem [#allocation6], %s319
          %321 = dma.done %s317, 128
        $region52: #{tpu_custom_call.1} parent=43 // pred_fallthru
          _
      $region44: #{tpu_custom_call.1} parent=5 // pred_fallthru
        _
    $region6: #{tpu_custom_call.1} parent=1 // loop_footer
      %s23 = sadd.s32 1, %s19
    $region7: #{tpu_custom_call.1} parent=1 // loop_footer_branch
      %18 = sbr.rel target = $region3
    $region8: #{tpu_custom_call.1} parent=1 // loop_exit
      _
    %322 = vsyncpa [#allocation3], 1
    %s323 = scalar_lea.sflag [#allocation3], 1
    %324 = vsyncpa %s323, 1
    %325 = vsyncpa [#allocation4], 1
    %s326 = scalar_lea.sflag [#allocation4], 1
    %327 = vsyncpa %s326, 1
    %328 = vsyncpa [#allocation7], 1
    %s329 = scalar_lea.sflag [#allocation7], 1
    %330 = vsyncpa %s329, 1

</llo_original>
